<compile_context>
chip_gen: v6e
topology: v6e:2x2x1
jax: 0.10.0
libtpu: 0.0.40
codegen_flags: <defaults>
</compile_context>

<pallas_src>
import functools

import jax
import jax.numpy as jnp
from jax.experimental import pallas as pl
from jax.experimental.pallas import tpu as pltpu


TILE = 256                      # MXU-sized tile for v6e/v7x (multiple of 128 -> fine on v5e)
VMEM_LIMIT = 32 * 1024 * 1024   # explicit scoped-VMEM budget, safe on v5e/v6e/v7x


# --------------------------------------------------------------------------
# Kernel 1: one Chebyshev recursion stage.
#   T_new[rows i] = scale * sum_j L_hat[i, j] @ T_prev[rows j]  -  T_prev2[rows i]
# grid = (n_row_tiles, n_col_tiles); col axis is the reduction.
# --------------------------------------------------------------------------
def cheb_stage_kernel(lhat_ref, tprev_ref, tprev2_ref, tnew_ref, acc_ref, *, scale):
    j = pl.program_id(1)

    @pl.when(j == 0)
    def _():
        acc_ref[...] = jnp.zeros_like(acc_ref)

    # bf16 operands into the MXU, f32 accumulation (dominant matmul).
    acc_ref[...] += jnp.dot(
        lhat_ref[...],
        tprev_ref[...].astype(jnp.bfloat16),
        preferred_element_type=jnp.float32,
    )

    @pl.when(j == pl.num_programs(1) - 1)
    def _():
        # Recursion combine stays in f32.
        tnew_ref[...] = scale * acc_ref[...] - tprev2_ref[...]


def _cheb_stage(lhat_bf16, t_prev, t_prev2, scale, tile):
    np_, f_in = t_prev.shape
    n_tiles = np_ // tile
    kernel = functools.partial(cheb_stage_kernel, scale=scale)
    return pl.pallas_call(
        kernel,
        out_shape=jax.ShapeDtypeStruct((np_, f_in), jnp.float32),
        grid_spec=pltpu.PrefetchScalarGridSpec(
            num_scalar_prefetch=0,
            grid=(n_tiles, n_tiles),
            in_specs=[
                pl.BlockSpec((tile, tile), lambda i, j: (i, j)),   # L_hat tile (bf16)
                pl.BlockSpec((tile, f_in), lambda i, j: (j, 0)),   # T_{k-1} col-block
                pl.BlockSpec((tile, f_in), lambda i, j: (i, 0)),   # T_{k-2} row-block
            ],
            out_specs=pl.BlockSpec((tile, f_in), lambda i, j: (i, 0)),
            scratch_shapes=[pltpu.VMEM((tile, f_in), jnp.float32)],
        ),
        compiler_params=pltpu.CompilerParams(
            dimension_semantics=("parallel", "arbitrary"),
            vmem_limit_bytes=VMEM_LIMIT,
        ),
    )(lhat_bf16, t_prev, t_prev2)


# --------------------------------------------------------------------------
# Kernel 2: fused output projection + bias + ReLU.
#   out = ReLU([T_0 | T_1 | ... | T_{K-1}] @ W_stacked + b)
# Single MXU issue over the K*F_in contraction; lane-dense (128-wide) store.
# --------------------------------------------------------------------------
def cheb_output_kernel(tall_ref, w_ref, b_ref, o_ref):
    acc = jnp.dot(tall_ref[...], w_ref[...], preferred_element_type=jnp.float32)
    o_ref[...] = jnp.maximum(acc + b_ref[...], 0.0)


def _cheb_output(t_all, w_pad, b_pad, tile):
    np_, kf = t_all.shape
    f_out_pad = w_pad.shape[1]
    n_tiles = np_ // tile
    return pl.pallas_call(
        cheb_output_kernel,
        out_shape=jax.ShapeDtypeStruct((np_, f_out_pad), jnp.float32),
        grid_spec=pltpu.PrefetchScalarGridSpec(
            num_scalar_prefetch=0,
            grid=(n_tiles,),
            in_specs=[
                pl.BlockSpec((tile, kf), lambda i: (i, 0)),        # stacked T_k
                pl.BlockSpec((kf, f_out_pad), lambda i: (0, 0)),   # stacked weights
                pl.BlockSpec((1, f_out_pad), lambda i: (0, 0)),    # bias
            ],
            out_specs=pl.BlockSpec((tile, f_out_pad), lambda i: (i, 0)),
        ),
        compiler_params=pltpu.CompilerParams(
            dimension_semantics=("parallel",),
            vmem_limit_bytes=VMEM_LIMIT,
        ),
    )(t_all, w_pad, b_pad)


# --------------------------------------------------------------------------
# JAX glue
# --------------------------------------------------------------------------
def build_scaled_laplacian(edge_index, edge_weight, num_nodes):
    """Dense L_hat = -D^{-1/2} A D^{-1/2} with A[dst, src] = w.

    Matches torch_geometric ChebConv.__norm__ (normalization='sym',
    lambda_max=2.0 default, self-loops removed -> zero diagonal).
    Note: degree is accumulated at edge_index[0] (source), exactly as PyG's
    get_laplacian does; for undirected graphs edge weights are assumed
    symmetric per pair.
    """
    src = edge_index[0]
    dst = edge_index[1]
    w = jnp.where(src != dst, edge_weight, 0.0).astype(jnp.float32)

    deg = jnp.zeros((num_nodes,), jnp.float32).at[src].add(w)
    dinv_sqrt = jnp.where(deg > 0.0, 1.0 / jnp.sqrt(deg), 0.0)
    norm = -dinv_sqrt[src] * w * dinv_sqrt[dst]

    lhat = jnp.zeros((num_nodes, num_nodes), jnp.float32).at[dst, src].add(norm)
    return lhat


def epipolar_cheb_forward(x, edge_index, edge_weight, weights, bias, *, tile=TILE):
    """x: [N, F_in] f32; edge_index: [2, E] i32; edge_weight: [E] f32;
    weights: [K, F_in, F_out]; bias: [F_out]."""
    n, f_in = x.shape
    k_order, _, f_out = weights.shape

    np_ = ((n + tile - 1) // tile) * tile          # pad nodes to tile multiple
    f_out_pad = ((f_out + 127) // 128) * 128       # lane-dense output width

    lhat = build_scaled_laplacian(edge_index, edge_weight, n)
    lhat_p = jnp.zeros((np_, np_), jnp.bfloat16).at[:n, :n].set(
        lhat.astype(jnp.bfloat16))
    x_p = jnp.zeros((np_, f_in), jnp.float32).at[:n, :].set(x.astype(jnp.float32))

    # Chebyshev recursion: one tiled, pipelined pass over L_hat per stage.
    t_list = [x_p]
    t_prev2 = jnp.zeros_like(x_p)
    t_prev = x_p
    for k in range(1, k_order):
        scale = 1.0 if k == 1 else 2.0             # T_1 = L x ; T_k = 2 L T_{k-1} - T_{k-2}
        t_new = _cheb_stage(lhat_p, t_prev, t_prev2, scale, tile)
        t_list.append(t_new)
        t_prev2, t_prev = t_prev, t_new

    t_all = jnp.concatenate(t_list, axis=1)        # [Np, K*F_in]
    w_stacked = weights.astype(jnp.float32).reshape(k_order * f_in, f_out)
    w_pad = jnp.zeros((k_order * f_in, f_out_pad), jnp.float32).at[:, :f_out].set(w_stacked)
    b_pad = jnp.zeros((1, f_out_pad), jnp.float32).at[0, :f_out].set(
        bias.astype(jnp.float32))

    out_pad = _cheb_output(t_all, w_pad, b_pad, tile)
    return out_pad[:n, :f_out]


# --------------------------------------------------------------------------
# Pure-JAX references for verification
# --------------------------------------------------------------------------
def reference_forward_f32(x, edge_index, edge_weight, weights, bias):
    n = x.shape[0]
    k_order = weights.shape[0]
    lhat = build_scaled_laplacian(edge_index, edge_weight, n)
    t_prev = x
    out = t_prev @ weights[0]
    if k_order > 1:
        t_cur = lhat @ t_prev
        out = out + t_cur @ weights[1]
        for k in range(2, k_order):
            t_new = 2.0 * (lhat @ t_cur) - t_prev
            out = out + t_new @ weights[k]
            t_prev, t_cur = t_cur, t_new
    return jnp.maximum(out + bias[None, :], 0.0)


def reference_forward_matched(x, edge_index, edge_weight, weights, bias):
    """Mirrors the kernel's bf16-operand / f32-accumulate arithmetic."""
    n, f_in = x.shape
    k_order = weights.shape[0]
    lhat = build_scaled_laplacian(edge_index, edge_weight, n).astype(jnp.bfloat16)

    def lmat(t):
        return jnp.dot(lhat, t.astype(jnp.bfloat16),
                       preferred_element_type=jnp.float32)

    t_list = [x.astype(jnp.float32)]
    if k_order > 1:
        t_list.append(lmat(t_list[0]))
    for k in range(2, k_order):
        t_list.append(2.0 * lmat(t_list[-1]) - t_list[-2])

    t_all = jnp.concatenate(t_list, axis=1)
    w = weights.astype(jnp.float32).reshape(k_order * f_in, -1)
    out = jnp.dot(t_all, w, preferred_element_type=jnp.float32)
    return jnp.maximum(out + bias[None, :], 0.0)


if __name__ == "__main__":
    # Shapes consistent with the module:
    #   epipolar_conv1_input_channels  = 8
    #   epipolar_conv1_output_channels = 16
    #   conv1_kernel_size (Chebyshev K) = 3
    N, F_IN, F_OUT, K = 16, 8, 16, 3

    key = jax.random.PRNGKey(0)
    kx, kw, kb, kew = jax.random.split(key, 4)

    x = jax.random.normal(kx, (N, F_IN), dtype=jnp.float32)

    # symmetric ring graph: each node <-> next node (E = 2N edges)
    nodes = jnp.arange(N, dtype=jnp.int32)
    nxt = (nodes + 1) % N
    src = jnp.concatenate([nodes, nxt])
    dst = jnp.concatenate([nxt, nodes])
    edge_index = jnp.stack([src, dst], axis=0)
    edge_weight = jax.random.uniform(kew, (2 * N,), dtype=jnp.float32,
                                     minval=0.5, maxval=1.5)

    limit = (6.0 / (F_IN + F_OUT)) ** 0.5
    weights = jax.random.uniform(kw, (K, F_IN, F_OUT), dtype=jnp.float32,
                                 minval=-limit, maxval=limit)
    bias = jax.random.uniform(kb, (F_OUT,), dtype=jnp.float32,
                              minval=-0.1, maxval=0.1)

    out = epipolar_cheb_forward(x, edge_index, edge_weight, weights, bias)
    out = jax.block_until_ready(out)
    assert out.shape == (N, F_OUT)

    ref_matched = reference_forward_matched(x, edge_index, edge_weight, weights, bias)
    ref_f32 = reference_forward_f32(x, edge_index, edge_weight, weights, bias)

    # Tight check vs a reference using the same bf16-operand / f32-accumulate math.
    assert jnp.allclose(out, ref_matched, atol=1e-3, rtol=1e-3), "mismatch vs matched reference"
    # Loose check vs the full-f32 ChebConv+ReLU spec (bf16 MXU operands).
    assert jnp.allclose(out, ref_f32, atol=5e-2, rtol=5e-2), "mismatch vs f32 reference"

    print("KERNEL_OK")
</pallas_src>

<mosaic_0001>
module attributes {stable_mosaic.version = 11 : i64} {
  func.func @cheb_stage_kernel(%arg0: i32, %arg1: i32, %arg2: memref<256x256xbf16, #tpu.memory_space<vmem>>, %arg3: memref<256x8xf32, #tpu.memory_space<vmem>>, %arg4: memref<256x8xf32, #tpu.memory_space<vmem>>, %arg5: memref<256x8xf32, #tpu.memory_space<vmem>>, %arg6: memref<256x8xf32, #tpu.memory_space<vmem>>) attributes {dimension_semantics = [#tpu.dimension_semantics<parallel>, #tpu.dimension_semantics<arbitrary>], iteration_bounds = array<i64: 1, 1>, scalar_prefetch = 0 : i64, scratch_operands = 1 : i64, tpu.core_type = #tpu.core_type<tc>, window_params = [{transform_indices = @transform_0, window_bounds = array<i64: 256, 256>}, {transform_indices = @transform_1, window_bounds = array<i64: 256, 8>}, {transform_indices = @transform_2, window_bounds = array<i64: 256, 8>}, {transform_indices = @transform_3, window_bounds = array<i64: 256, 8>}]} {
    %c0_i32 = arith.constant 0 : i32
    %0 = arith.cmpi eq, %arg1, %c0_i32 : i32
    %1 = arith.extui %0 : i1 to i32
    %c0_i32_0 = arith.constant 0 : i32
    %2 = arith.cmpi ne, %1, %c0_i32_0 : i32
    scf.if %2 {
      %cst_10 = arith.constant 0.000000e+00 : f32
      %13 = vector.broadcast %cst_10 : f32 to vector<256x8xf32>
      %c0_11 = arith.constant 0 : index
      %c0_12 = arith.constant 0 : index
      %14 = vector.load %arg6[%c0_11, %c0_12] : memref<256x8xf32, #tpu.memory_space<vmem>>, vector<256x8xf32>
      tpu.vector_store %arg6[%c0_11, %c0_12], %13 {strides = array<i32>} : memref<256x8xf32, #tpu.memory_space<vmem>>, vector<256x8xf32>,
    } else {
    }
    %c0 = arith.constant 0 : index
    %c0_1 = arith.constant 0 : index
    %3 = vector.load %arg6[%c0, %c0_1] : memref<256x8xf32, #tpu.memory_space<vmem>>, vector<256x8xf32>
    %c0_2 = arith.constant 0 : index
    %c0_3 = arith.constant 0 : index
    %4 = vector.load %arg2[%c0_2, %c0_3] : memref<256x256xbf16, #tpu.memory_space<vmem>>, vector<256x256xbf16>
    %c0_4 = arith.constant 0 : index
    %c0_5 = arith.constant 0 : index
    %5 = vector.load %arg3[%c0_4, %c0_5] : memref<256x8xf32, #tpu.memory_space<vmem>>, vector<256x8xf32>
    %6 = arith.truncf %5 : vector<256x8xf32> to vector<256x8xbf16>
    %cst = arith.constant dense<0.000000e+00> : vector<256x8xf32>
    %7 = tpu.matmul %4, %6, %cst {dimension_numbers = #tpu.dot_dimension_numbers<[1], [0], [0], [1], [0, 0, 1, 1], [], []>} : vector<256x256xbf16>, vector<256x8xbf16>, vector<256x8xf32> -> vector<256x8xf32>
    %8 = arith.addf %3, %7 : vector<256x8xf32>
    %c0_6 = arith.constant 0 : index
    %c0_7 = arith.constant 0 : index
    %9 = vector.load %arg6[%c0_6, %c0_7] : memref<256x8xf32, #tpu.memory_space<vmem>>, vector<256x8xf32>
    tpu.vector_store %arg6[%c0_6, %c0_7], %8 {strides = array<i32>} : memref<256x8xf32, #tpu.memory_space<vmem>>, vector<256x8xf32>,
    %c0_i32_8 = arith.constant 0 : i32
    %10 = arith.cmpi eq, %arg1, %c0_i32_8 : i32
    %11 = arith.extui %10 : i1 to i32
    %c0_i32_9 = arith.constant 0 : i32
    %12 = arith.cmpi ne, %11, %c0_i32_9 : i32
    scf.if %12 {
      %c0_10 = arith.constant 0 : index
      %c0_11 = arith.constant 0 : index
      %13 = vector.load %arg6[%c0_10, %c0_11] : memref<256x8xf32, #tpu.memory_space<vmem>>, vector<256x8xf32>
      %cst_12 = arith.constant 1.000000e+00 : f32
      %14 = vector.broadcast %cst_12 : f32 to vector<256x8xf32>
      %15 = arith.mulf %14, %13 : vector<256x8xf32>
      %c0_13 = arith.constant 0 : index
      %c0_14 = arith.constant 0 : index
      %16 = vector.load %arg4[%c0_13, %c0_14] : memref<256x8xf32, #tpu.memory_space<vmem>>, vector<256x8xf32>
      %17 = arith.subf %15, %16 : vector<256x8xf32>
      %c0_15 = arith.constant 0 : index
      %c0_16 = arith.constant 0 : index
      %18 = vector.load %arg5[%c0_15, %c0_16] : memref<256x8xf32, #tpu.memory_space<vmem>>, vector<256x8xf32>
      tpu.vector_store %arg5[%c0_15, %c0_16], %17 {strides = array<i32>} : memref<256x8xf32, #tpu.memory_space<vmem>>, vector<256x8xf32>,
    } else {
    }
    return
  }
  func.func @transform_0(%arg0: i32, %arg1: i32) -> (i32, i32) {
    %c0_i32 = arith.constant 0 : i32
    return %arg0, %arg1 : i32, i32
  }
  func.func @transform_1(%arg0: i32, %arg1: i32) -> (i32, i32) {
    %c0_i32 = arith.constant 0 : i32
    %c0_i32_0 = arith.constant 0 : i32
    return %arg1, %c0_i32 : i32, i32
  }
  func.func @transform_2(%arg0: i32, %arg1: i32) -> (i32, i32) {
    %c0_i32 = arith.constant 0 : i32
    %c0_i32_0 = arith.constant 0 : i32
    return %arg0, %c0_i32 : i32, i32
  }
  func.func @transform_3(%arg0: i32, %arg1: i32) -> (i32, i32) {
    %c0_i32 = arith.constant 0 : i32
    %c0_i32_0 = arith.constant 0 : i32
    return %arg0, %c0_i32 : i32, i32
  }
}

</mosaic_0001>

<llo_original>
// kernel: tpu_custom_call.1
$region0: #{tpu_custom_call.1}
  #allocation0 [shape = 'u32[]', space=smem, size = 0x4, offset = 0x4, fixed_abs, tag = 'smem constant byte address 0x4 - core index']
  #allocation1 [shape = 'u32[144,128]{1,0:T(1,128)}', space=vmem, size = 0x12000, scoped, tag = 'internal scratch']
  #allocation2 [shape = 'f32[256,8]{1,0:T(8,128)}', space=vmem, size = 0x20000, scoped, tag = 'scratch operand']
  %s0 = inlined_call_operand.vmem [shape: bf16[256,256], index: 0, kind: input, shape index: {}]
  %s1 = inlined_call_operand.vmem [shape: f32[256,8], index: 1, kind: input, shape index: {}]
  %s2 = inlined_call_operand.vmem [shape: f32[256,8], index: 2, kind: input, shape index: {}]
  %s3 = inlined_call_operand.vmem [shape: f32[256,8], index: 3, kind: output, shape index: {}]
  %s4 = sld [smem:[#allocation0]]
  $region30: #{tpu_custom_call.1} parent=0
    _
  %s6 = ssub.s32 1, %s4
  %s7 = scalar_select 0, %s6, %s4
  // Predicated region
  $region2: #{tpu_custom_call.1} parent=0 // pred_check
    _
  $region3: #{tpu_custom_call.1} parent=0 // pred_check_branch
    %9 = sbr.rel (0) target = $region5
  $region4: #{tpu_custom_call.1} parent=0 // pred_region
    _
  $region5: #{tpu_custom_call.1} parent=0 // pred_fallthru
    _
  // Predicated region
  $region6: #{tpu_custom_call.1} parent=0 // pred_check
    _
  $region7: #{tpu_custom_call.1} parent=0 // pred_check_branch
    %11 = sbr.rel (0) target = $region9
  $region8: #{tpu_custom_call.1} parent=0 // pred_region
    _
  $region9: #{tpu_custom_call.1} parent=0 // pred_fallthru
    _
  // Predicated region
  $region10: #{tpu_custom_call.1} parent=0 // pred_check
    _
  $region11: #{tpu_custom_call.1} parent=0 // pred_check_branch
    %13 = sbr.rel (0) target = $region13
  $region12: #{tpu_custom_call.1} parent=0 // pred_region
    _
  $region13: #{tpu_custom_call.1} parent=0 // pred_fallthru
    _
  %p15 = scmp.eq.s32.totalorder 0, 0
  // Predicated region
  $region14: #{tpu_custom_call.1} parent=0 // pred_check
    %p16 = pneg %p15
  $region15: #{tpu_custom_call.1} parent=0 // pred_check_branch
    %18 = sbr.rel (%p16) target = $region17
  $region16: #{tpu_custom_call.1} parent=0 // pred_region
    %vm19 = vcmask 64512
    %20 = vst.msk [vmem:[#allocation2] sm:$0xff] %vm19, 0.0
    %21 = vst.msk [vmem:[#allocation2 + $0x8] sm:$0xff] %vm19, 0.0
    %22 = vst.msk [vmem:[#allocation2 + $0x10] sm:$0xff] %vm19, 0.0
    %23 = vst.msk [vmem:[#allocation2 + $0x18] sm:$0xff] %vm19, 0.0
    %24 = vst.msk [vmem:[#allocation2 + $0x20] sm:$0xff] %vm19, 0.0
    %25 = vst.msk [vmem:[#allocation2 + $0x28] sm:$0xff] %vm19, 0.0
    %26 = vst.msk [vmem:[#allocation2 + $0x30] sm:$0xff] %vm19, 0.0
    %27 = vst.msk [vmem:[#allocation2 + $0x38] sm:$0xff] %vm19, 0.0
    %28 = vst.msk [vmem:[#allocation2 + $0x40] sm:$0xff] %vm19, 0.0
    %29 = vst.msk [vmem:[#allocation2 + $0x48] sm:$0xff] %vm19, 0.0
    %30 = vst.msk [vmem:[#allocation2 + $0x50] sm:$0xff] %vm19, 0.0
    %31 = vst.msk [vmem:[#allocation2 + $0x58] sm:$0xff] %vm19, 0.0
    %32 = vst.msk [vmem:[#allocation2 + $0x60] sm:$0xff] %vm19, 0.0
    %33 = vst.msk [vmem:[#allocation2 + $0x68] sm:$0xff] %vm19, 0.0
    %34 = vst.msk [vmem:[#allocation2 + $0x70] sm:$0xff] %vm19, 0.0
    %35 = vst.msk [vmem:[#allocation2 + $0x78] sm:$0xff] %vm19, 0.0
    %36 = vst.msk [vmem:[#allocation2 + $0x80] sm:$0xff] %vm19, 0.0
    %37 = vst.msk [vmem:[#allocation2 + $0x88] sm:$0xff] %vm19, 0.0
    %38 = vst.msk [vmem:[#allocation2 + $0x90] sm:$0xff] %vm19, 0.0
    %39 = vst.msk [vmem:[#allocation2 + $0x98] sm:$0xff] %vm19, 0.0
    %40 = vst.msk [vmem:[#allocation2 + $0xa0] sm:$0xff] %vm19, 0.0
    %41 = vst.msk [vmem:[#allocation2 + $0xa8] sm:$0xff] %vm19, 0.0
    %42 = vst.msk [vmem:[#allocation2 + $0xb0] sm:$0xff] %vm19, 0.0
    %43 = vst.msk [vmem:[#allocation2 + $0xb8] sm:$0xff] %vm19, 0.0
    %44 = vst.msk [vmem:[#allocation2 + $0xc0] sm:$0xff] %vm19, 0.0
    %45 = vst.msk [vmem:[#allocation2 + $0xc8] sm:$0xff] %vm19, 0.0
    %46 = vst.msk [vmem:[#allocation2 + $0xd0] sm:$0xff] %vm19, 0.0
    %47 = vst.msk [vmem:[#allocation2 + $0xd8] sm:$0xff] %vm19, 0.0
    %48 = vst.msk [vmem:[#allocation2 + $0xe0] sm:$0xff] %vm19, 0.0
    %49 = vst.msk [vmem:[#allocation2 + $0xe8] sm:$0xff] %vm19, 0.0
    %50 = vst.msk [vmem:[#allocation2 + $0xf0] sm:$0xff] %vm19, 0.0
    %51 = vst.msk [vmem:[#allocation2 + $0xf8] sm:$0xff] %vm19, 0.0
  $region17: #{tpu_custom_call.1} parent=0 // pred_fallthru
    _
  %v52 = vld [vmem:[#allocation2] sm:$0xff]
  %v53 = vld [vmem:[#allocation2 + $0x8] sm:$0xff]
  %v54 = vld [vmem:[#allocation2 + $0x10] sm:$0xff]
  %v55 = vld [vmem:[#allocation2 + $0x18] sm:$0xff]
  %v56 = vld [vmem:[#allocation2 + $0x20] sm:$0xff]
  %v57 = vld [vmem:[#allocation2 + $0x28] sm:$0xff]
  %v58 = vld [vmem:[#allocation2 + $0x30] sm:$0xff]
  %v59 = vld [vmem:[#allocation2 + $0x38] sm:$0xff]
  %v60 = vld [vmem:[#allocation2 + $0x40] sm:$0xff]
  %v61 = vld [vmem:[#allocation2 + $0x48] sm:$0xff]
  %v62 = vld [vmem:[#allocation2 + $0x50] sm:$0xff]
  %v63 = vld [vmem:[#allocation2 + $0x58] sm:$0xff]
  %v64 = vld [vmem:[#allocation2 + $0x60] sm:$0xff]
  %v65 = vld [vmem:[#allocation2 + $0x68] sm:$0xff]
  %v66 = vld [vmem:[#allocation2 + $0x70] sm:$0xff]
  %v67 = vld [vmem:[#allocation2 + $0x78] sm:$0xff]
  %v68 = vld [vmem:[#allocation2 + $0x80] sm:$0xff]
  %v69 = vld [vmem:[#allocation2 + $0x88] sm:$0xff]
  %v70 = vld [vmem:[#allocation2 + $0x90] sm:$0xff]
  %v71 = vld [vmem:[#allocation2 + $0x98] sm:$0xff]
  %v72 = vld [vmem:[#allocation2 + $0xa0] sm:$0xff]
  %v73 = vld [vmem:[#allocation2 + $0xa8] sm:$0xff]
  %v74 = vld [vmem:[#allocation2 + $0xb0] sm:$0xff]
  %v75 = vld [vmem:[#allocation2 + $0xb8] sm:$0xff]
  %v76 = vld [vmem:[#allocation2 + $0xc0] sm:$0xff]
  %v77 = vld [vmem:[#allocation2 + $0xc8] sm:$0xff]
  %v78 = vld [vmem:[#allocation2 + $0xd0] sm:$0xff]
  %v79 = vld [vmem:[#allocation2 + $0xd8] sm:$0xff]
  %v80 = vld [vmem:[#allocation2 + $0xe0] sm:$0xff]
  %v81 = vld [vmem:[#allocation2 + $0xe8] sm:$0xff]
  %v82 = vld [vmem:[#allocation2 + $0xf0] sm:$0xff]
  %v83 = vld [vmem:[#allocation2 + $0xf8] sm:$0xff]
  %v84 = vld [vmem:[%s0] sm:$0xff]
  %v85 = vld [vmem:[%s0 + $0x8] sm:$0xff]
  %v86 = vld [vmem:[%s0 + $0x10] sm:$0xff]
  %v87 = vld [vmem:[%s0 + $0x18] sm:$0xff]
  %v88 = vld [vmem:[%s0 + $0x20] sm:$0xff]
  %v89 = vld [vmem:[%s0 + $0x28] sm:$0xff]
  %v90 = vld [vmem:[%s0 + $0x30] sm:$0xff]
  %v91 = vld [vmem:[%s0 + $0x38] sm:$0xff]
  %v92 = vld [vmem:[%s0 + $0x40] sm:$0xff]
  %v93 = vld [vmem:[%s0 + $0x48] sm:$0xff]
  %v94 = vld [vmem:[%s0 + $0x50] sm:$0xff]
  %v95 = vld [vmem:[%s0 + $0x58] sm:$0xff]
  %v96 = vld [vmem:[%s0 + $0x60] sm:$0xff]
  %v97 = vld [vmem:[%s0 + $0x68] sm:$0xff]
  %v98 = vld [vmem:[%s0 + $0x70] sm:$0xff]
  %v99 = vld [vmem:[%s0 + $0x78] sm:$0xff]
  %v100 = vld [vmem:[%s0 + $0x80] sm:$0xff]
  %v101 = vld [vmem:[%s0 + $0x88] sm:$0xff]
  %v102 = vld [vmem:[%s0 + $0x90] sm:$0xff]
  %v103 = vld [vmem:[%s0 + $0x98] sm:$0xff]
  %v104 = vld [vmem:[%s0 + $0xa0] sm:$0xff]
  %v105 = vld [vmem:[%s0 + $0xa8] sm:$0xff]
  %v106 = vld [vmem:[%s0 + $0xb0] sm:$0xff]
  %v107 = vld [vmem:[%s0 + $0xb8] sm:$0xff]
  %v108 = vld [vmem:[%s0 + $0xc0] sm:$0xff]
  %v109 = vld [vmem:[%s0 + $0xc8] sm:$0xff]
  %v110 = vld [vmem:[%s0 + $0xd0] sm:$0xff]
  %v111 = vld [vmem:[%s0 + $0xd8] sm:$0xff]
  %v112 = vld [vmem:[%s0 + $0xe0] sm:$0xff]
  %v113 = vld [vmem:[%s0 + $0xe8] sm:$0xff]
  %v114 = vld [vmem:[%s0 + $0xf0] sm:$0xff]
  %v115 = vld [vmem:[%s0 + $0xf8] sm:$0xff]
  %v116 = vld [vmem:[%s1] sm:$0xff]
  %v117 = vld [vmem:[%s1 + $0x8] sm:$0xff]
  %v118 = vld [vmem:[%s1 + $0x10] sm:$0xff]
  %v119 = vld [vmem:[%s1 + $0x18] sm:$0xff]
  %v120 = vld [vmem:[%s1 + $0x20] sm:$0xff]
  %v121 = vld [vmem:[%s1 + $0x28] sm:$0xff]
  %v122 = vld [vmem:[%s1 + $0x30] sm:$0xff]
  %v123 = vld [vmem:[%s1 + $0x38] sm:$0xff]
  %v124 = vld [vmem:[%s1 + $0x40] sm:$0xff]
  %v125 = vld [vmem:[%s1 + $0x48] sm:$0xff]
  %v126 = vld [vmem:[%s1 + $0x50] sm:$0xff]
  %v127 = vld [vmem:[%s1 + $0x58] sm:$0xff]
  %v128 = vld [vmem:[%s1 + $0x60] sm:$0xff]
  %v129 = vld [vmem:[%s1 + $0x68] sm:$0xff]
  %v130 = vld [vmem:[%s1 + $0x70] sm:$0xff]
  %v131 = vld [vmem:[%s1 + $0x78] sm:$0xff]
  %v132 = vld [vmem:[%s1 + $0x80] sm:$0xff]
  %v133 = vld [vmem:[%s1 + $0x88] sm:$0xff]
  %v134 = vld [vmem:[%s1 + $0x90] sm:$0xff]
  %v135 = vld [vmem:[%s1 + $0x98] sm:$0xff]
  %v136 = vld [vmem:[%s1 + $0xa0] sm:$0xff]
  %v137 = vld [vmem:[%s1 + $0xa8] sm:$0xff]
  %v138 = vld [vmem:[%s1 + $0xb0] sm:$0xff]
  %v139 = vld [vmem:[%s1 + $0xb8] sm:$0xff]
  %v140 = vld [vmem:[%s1 + $0xc0] sm:$0xff]
  %v141 = vld [vmem:[%s1 + $0xc8] sm:$0xff]
  %v142 = vld [vmem:[%s1 + $0xd0] sm:$0xff]
  %v143 = vld [vmem:[%s1 + $0xd8] sm:$0xff]
  %v144 = vld [vmem:[%s1 + $0xe0] sm:$0xff]
  %v145 = vld [vmem:[%s1 + $0xe8] sm:$0xff]
  %v146 = vld [vmem:[%s1 + $0xf0] sm:$0xff]
  %v147 = vld [vmem:[%s1 + $0xf8] sm:$0xff]
  %v148 = vpack.c.bf16 %v117, %v116
  %v149 = vpack.c.bf16 %v119, %v118
  %v150 = vpack.c.bf16 %v121, %v120
  %v151 = vpack.c.bf16 %v123, %v122
  %v152 = vpack.c.bf16 %v125, %v124
  %v153 = vpack.c.bf16 %v127, %v126
  %v154 = vpack.c.bf16 %v129, %v128
  %v155 = vpack.c.bf16 %v131, %v130
  %v156 = vpack.c.bf16 %v133, %v132
  %v157 = vpack.c.bf16 %v135, %v134
  %v158 = vpack.c.bf16 %v137, %v136
  %v159 = vpack.c.bf16 %v139, %v138
  %v160 = vpack.c.bf16 %v141, %v140
  %v161 = vpack.c.bf16 %v143, %v142
  %v162 = vpack.c.bf16 %v145, %v144
  %v163 = vpack.c.bf16 %v147, %v146
  %v196 = vunpack.c.l.b16 %v84
  %v197 = vunpack.c.h.b16 %v84
  %v198 = vunpack.c.l.b16 %v85
  %v199 = vunpack.c.h.b16 %v85
  %v200 = vunpack.c.l.b16 %v86
  %v201 = vunpack.c.h.b16 %v86
  %v202 = vunpack.c.l.b16 %v87
  %v203 = vunpack.c.h.b16 %v87
  %v204 = vunpack.c.l.b16 %v88
  %v205 = vunpack.c.h.b16 %v88
  %v206 = vunpack.c.l.b16 %v89
  %v207 = vunpack.c.h.b16 %v89
  %v208 = vunpack.c.l.b16 %v90
  %v209 = vunpack.c.h.b16 %v90
  %v210 = vunpack.c.l.b16 %v91
  %v211 = vunpack.c.h.b16 %v91
  %v212 = vunpack.c.l.b16 %v92
  %v213 = vunpack.c.h.b16 %v92
  %v214 = vunpack.c.l.b16 %v93
  %v215 = vunpack.c.h.b16 %v93
  %v216 = vunpack.c.l.b16 %v94
  %v217 = vunpack.c.h.b16 %v94
  %v218 = vunpack.c.l.b16 %v95
  %v219 = vunpack.c.h.b16 %v95
  %v220 = vunpack.c.l.b16 %v96
  %v221 = vunpack.c.h.b16 %v96
  %v222 = vunpack.c.l.b16 %v97
  %v223 = vunpack.c.h.b16 %v97
  %v224 = vunpack.c.l.b16 %v98
  %v225 = vunpack.c.h.b16 %v98
  %v226 = vunpack.c.l.b16 %v99
  %v227 = vunpack.c.h.b16 %v99
  %v228 = vunpack.c.l.b16 %v100
  %v229 = vunpack.c.h.b16 %v100
  %v230 = vunpack.c.l.b16 %v101
  %v231 = vunpack.c.h.b16 %v101
  %v232 = vunpack.c.l.b16 %v102
  %v233 = vunpack.c.h.b16 %v102
  %v234 = vunpack.c.l.b16 %v103
  %v235 = vunpack.c.h.b16 %v103
  %v236 = vunpack.c.l.b16 %v104
  %v237 = vunpack.c.h.b16 %v104
  %v238 = vunpack.c.l.b16 %v105
  %v239 = vunpack.c.h.b16 %v105
  %v240 = vunpack.c.l.b16 %v106
  %v241 = vunpack.c.h.b16 %v106
  %v242 = vunpack.c.l.b16 %v107
  %v243 = vunpack.c.h.b16 %v107
  %v244 = vunpack.c.l.b16 %v108
  %v245 = vunpack.c.h.b16 %v108
  %v246 = vunpack.c.l.b16 %v109
  %v247 = vunpack.c.h.b16 %v109
  %v248 = vunpack.c.l.b16 %v110
  %v249 = vunpack.c.h.b16 %v110
  %v250 = vunpack.c.l.b16 %v111
  %v251 = vunpack.c.h.b16 %v111
  %v252 = vunpack.c.l.b16 %v112
  %v253 = vunpack.c.h.b16 %v112
  %v254 = vunpack.c.l.b16 %v113
  %v255 = vunpack.c.h.b16 %v113
  %v256 = vunpack.c.l.b16 %v114
  %v257 = vunpack.c.h.b16 %v114
  %v258 = vunpack.c.l.b16 %v115
  %v259 = vunpack.c.h.b16 %v115
  %v260 = vpack.c.b16 %v198, %v196
  %v261 = vpack.c.b16 %v199, %v197
  %v262 = vpack.c.b16 %v202, %v200
  %v263 = vpack.c.b16 %v203, %v201
  %v264 = vpack.c.b16 %v206, %v204
  %v265 = vpack.c.b16 %v207, %v205
  %v266 = vpack.c.b16 %v210, %v208
  %v267 = vpack.c.b16 %v211, %v209
  %v268 = vpack.c.b16 %v214, %v212
  %v269 = vpack.c.b16 %v215, %v213
  %v270 = vpack.c.b16 %v218, %v216
  %v271 = vpack.c.b16 %v219, %v217
  %v272 = vpack.c.b16 %v222, %v220
  %v273 = vpack.c.b16 %v223, %v221
  %v274 = vpack.c.b16 %v226, %v224
  %v275 = vpack.c.b16 %v227, %v225
  %v276 = vpack.c.b16 %v230, %v228
  %v277 = vpack.c.b16 %v231, %v229
  %v278 = vpack.c.b16 %v234, %v232
  %v279 = vpack.c.b16 %v235, %v233
  %v280 = vpack.c.b16 %v238, %v236
  %v281 = vpack.c.b16 %v239, %v237
  %v282 = vpack.c.b16 %v242, %v240
  %v283 = vpack.c.b16 %v243, %v241
  %v284 = vpack.c.b16 %v246, %v244
  %v285 = vpack.c.b16 %v247, %v245
  %v286 = vpack.c.b16 %v250, %v248
  %v287 = vpack.c.b16 %v251, %v249
  %v288 = vpack.c.b16 %v254, %v252
  %v289 = vpack.c.b16 %v255, %v253
  %v290 = vpack.c.b16 %v258, %v256
  %v291 = vpack.c.b16 %v259, %v257
  %324 = vmatprep.subr.bf16.mxu0 0
  %325 = vmatpush1.bf16.msra.mxu0 %v155
  %326 = vmatprep.subr.bf16.mxu0 0
  %327 = vmatpush1.bf16.msra.mxu0 %v154
  %328 = vmatprep.subr.bf16.mxu0 0
  %329 = vmatpush1.bf16.msra.mxu0 %v153
  %330 = vmatprep.subr.bf16.mxu0 0
  %331 = vmatpush1.bf16.msra.mxu0 %v152
  %332 = vmatprep.subr.bf16.mxu0 0
  %333 = vmatpush1.bf16.msra.mxu0 %v151
  %334 = vmatprep.subr.bf16.mxu0 0
  %335 = vmatpush1.bf16.msra.mxu0 %v150
  %336 = vmatprep.subr.bf16.mxu0 0
  %337 = vmatpush1.bf16.msra.mxu0 %v149
  %338 = vmatprep.subr.bf16.mxu0 0
  %339 = vmatpush1.bf16.msra.mxu0 %v148
  %340 = vmatprep.subr.bf16.mxu0 0
  %341 = vmatpush2.bf16.msra.mxu0 %v163
  %342 = vmatprep.subr.bf16.mxu0 0
  %343 = vmatpush2.bf16.msra.mxu0 %v162
  %344 = vmatprep.subr.bf16.mxu0 0
  %345 = vmatpush2.bf16.msra.mxu0 %v161
  %346 = vmatprep.subr.bf16.mxu0 0
  %347 = vmatpush2.bf16.msra.mxu0 %v160
  %348 = vmatprep.subr.bf16.mxu0 0
  %349 = vmatpush2.bf16.msra.mxu0 %v159
  %350 = vmatprep.subr.bf16.mxu0 0
  %351 = vmatpush2.bf16.msra.mxu0 %v158
  %352 = vmatprep.subr.bf16.mxu0 0
  %353 = vmatpush2.bf16.msra.mxu0 %v157
  %354 = vmatprep.subr.bf16.mxu0 0
  %355 = vmatpush2.bf16.msra.mxu0 %v156
  %356 = vmatprep.mubr.bf16.mxu0 %v261
  %357 = vmatmul.mubr.bf16.gmra.mxu0 %v260
  %v358 = vpop.f32.mrf.mxu0
  %v359 = vadd.f32 0.0, %v358
  %v360 = vpop.f32.mrf.mxu0
  %v361 = vpop.f32.mrf.mxu0
  %v362 = vadd.f32 0.0, %v361
  %v363 = vpop.f32.mrf.mxu0
  %364 = vmatprep.mubr.bf16.mxu0 %v263
  %365 = vmatmul.mubr.bf16.gmra.mxu0 %v262
  %v366 = vpop.f32.mrf.mxu0
  %v367 = vadd.f32 0.0, %v366
  %v368 = vpop.f32.mrf.mxu0
  %v369 = vpop.f32.mrf.mxu0
  %v370 = vadd.f32 0.0, %v369
  %v371 = vpop.f32.mrf.mxu0
  %372 = vmatprep.mubr.bf16.mxu0 %v265
  %373 = vmatmul.mubr.bf16.gmra.mxu0 %v264
  %v374 = vpop.f32.mrf.mxu0
  %v375 = vadd.f32 0.0, %v374
  %v376 = vpop.f32.mrf.mxu0
  %v377 = vpop.f32.mrf.mxu0
  %v378 = vadd.f32 0.0, %v377
  %v379 = vpop.f32.mrf.mxu0
  %380 = vmatprep.mubr.bf16.mxu0 %v267
  %381 = vmatmul.mubr.bf16.gmra.mxu0 %v266
  %v382 = vpop.f32.mrf.mxu0
  %v383 = vadd.f32 0.0, %v382
  %v384 = vpop.f32.mrf.mxu0
  %v385 = vpop.f32.mrf.mxu0
  %v386 = vadd.f32 0.0, %v385
  %v387 = vpop.f32.mrf.mxu0
  %388 = vmatprep.mubr.bf16.mxu0 %v269
  %389 = vmatmul.mubr.bf16.gmra.mxu0 %v268
  %v390 = vpop.f32.mrf.mxu0
  %v391 = vadd.f32 0.0, %v390
  %v392 = vpop.f32.mrf.mxu0
  %v393 = vpop.f32.mrf.mxu0
  %v394 = vadd.f32 0.0, %v393
  %v395 = vpop.f32.mrf.mxu0
  %396 = vmatprep.mubr.bf16.mxu0 %v271
  %397 = vmatmul.mubr.bf16.gmra.mxu0 %v270
  %v398 = vpop.f32.mrf.mxu0
  %v399 = vadd.f32 0.0, %v398
  %v400 = vpop.f32.mrf.mxu0
  %v401 = vpop.f32.mrf.mxu0
  %v402 = vadd.f32 0.0, %v401
  %v403 = vpop.f32.mrf.mxu0
  %404 = vmatprep.mubr.bf16.mxu0 %v273
  %405 = vmatmul.mubr.bf16.gmra.mxu0 %v272
  %v406 = vpop.f32.mrf.mxu0
  %v407 = vadd.f32 0.0, %v406
  %v408 = vpop.f32.mrf.mxu0
  %v409 = vpop.f32.mrf.mxu0
  %v410 = vadd.f32 0.0, %v409
  %v411 = vpop.f32.mrf.mxu0
  %412 = vmatprep.mubr.bf16.mxu0 %v275
  %413 = vmatmul.mubr.bf16.gmra.mxu0 %v274
  %v414 = vpop.f32.mrf.mxu0
  %v415 = vadd.f32 0.0, %v414
  %v416 = vpop.f32.mrf.mxu0
  %v417 = vpop.f32.mrf.mxu0
  %v418 = vadd.f32 0.0, %v417
  %v419 = vpop.f32.mrf.mxu0
  %420 = vmatprep.mubr.bf16.mxu0 %v277
  %421 = vmatmul.mubr.bf16.gmra.mxu0 %v276
  %v422 = vpop.f32.mrf.mxu0
  %v423 = vadd.f32 0.0, %v422
  %v424 = vpop.f32.mrf.mxu0
  %v425 = vpop.f32.mrf.mxu0
  %v426 = vadd.f32 0.0, %v425
  %v427 = vpop.f32.mrf.mxu0
  %428 = vmatprep.mubr.bf16.mxu0 %v279
  %429 = vmatmul.mubr.bf16.gmra.mxu0 %v278
  %v430 = vpop.f32.mrf.mxu0
  %v431 = vadd.f32 0.0, %v430
  %v432 = vpop.f32.mrf.mxu0
  %v433 = vpop.f32.mrf.mxu0
  %v434 = vadd.f32 0.0, %v433
  %v435 = vpop.f32.mrf.mxu0
  %436 = vmatprep.mubr.bf16.mxu0 %v281
  %437 = vmatmul.mubr.bf16.gmra.mxu0 %v280
  %v438 = vpop.f32.mrf.mxu0
  %v439 = vadd.f32 0.0, %v438
  %v440 = vpop.f32.mrf.mxu0
  %v441 = vpop.f32.mrf.mxu0
  %v442 = vadd.f32 0.0, %v441
  %v443 = vpop.f32.mrf.mxu0
  %444 = vmatprep.mubr.bf16.mxu0 %v283
  %445 = vmatmul.mubr.bf16.gmra.mxu0 %v282
  %v446 = vpop.f32.mrf.mxu0
  %v447 = vadd.f32 0.0, %v446
  %v448 = vpop.f32.mrf.mxu0
  %v449 = vpop.f32.mrf.mxu0
  %v450 = vadd.f32 0.0, %v449
  %v451 = vpop.f32.mrf.mxu0
  %452 = vmatprep.mubr.bf16.mxu0 %v285
  %453 = vmatmul.mubr.bf16.gmra.mxu0 %v284
  %v454 = vpop.f32.mrf.mxu0
  %v455 = vadd.f32 0.0, %v454
  %v456 = vpop.f32.mrf.mxu0
  %v457 = vpop.f32.mrf.mxu0
  %v458 = vadd.f32 0.0, %v457
  %v459 = vpop.f32.mrf.mxu0
  %460 = vmatprep.mubr.bf16.mxu0 %v287
  %461 = vmatmul.mubr.bf16.gmra.mxu0 %v286
  %v462 = vpop.f32.mrf.mxu0
  %v463 = vadd.f32 0.0, %v462
  %v464 = vpop.f32.mrf.mxu0
  %v465 = vpop.f32.mrf.mxu0
  %v466 = vadd.f32 0.0, %v465
  %v467 = vpop.f32.mrf.mxu0
  %468 = vmatprep.mubr.bf16.mxu0 %v289
  %469 = vmatmul.mubr.bf16.gmra.mxu0 %v288
  %v470 = vpop.f32.mrf.mxu0
  %v471 = vadd.f32 0.0, %v470
  %v472 = vpop.f32.mrf.mxu0
  %v473 = vpop.f32.mrf.mxu0
  %v474 = vadd.f32 0.0, %v473
  %v475 = vpop.f32.mrf.mxu0
  %476 = vmatprep.mubr.bf16.mxu0 %v291
  %477 = vmatmul.mubr.bf16.gmra.mxu0 %v290
  %v478 = vpop.f32.mrf.mxu0
  %v479 = vadd.f32 0.0, %v478
  %v480 = vpop.f32.mrf.mxu0
  %v481 = vpop.f32.mrf.mxu0
  %v482 = vadd.f32 0.0, %v481
  %v483 = vpop.f32.mrf.mxu0
  %484 = vdwg.mxu0
  %v485 = vadd.f32 %v52, %v359
  %v486 = vadd.f32 %v53, %v362
  %v487 = vadd.f32 %v54, %v367
  %v488 = vadd.f32 %v55, %v370
  %v489 = vadd.f32 %v56, %v375
  %v490 = vadd.f32 %v57, %v378
  %v491 = vadd.f32 %v58, %v383
  %v492 = vadd.f32 %v59, %v386
  %v493 = vadd.f32 %v60, %v391
  %v494 = vadd.f32 %v61, %v394
  %v495 = vadd.f32 %v62, %v399
  %v496 = vadd.f32 %v63, %v402
  %v497 = vadd.f32 %v64, %v407
  %v498 = vadd.f32 %v65, %v410
  %v499 = vadd.f32 %v66, %v415
  %v500 = vadd.f32 %v67, %v418
  %v501 = vadd.f32 %v68, %v423
  %v502 = vadd.f32 %v69, %v426
  %v503 = vadd.f32 %v70, %v431
  %v504 = vadd.f32 %v71, %v434
  %v505 = vadd.f32 %v72, %v439
  %v506 = vadd.f32 %v73, %v442
  %v507 = vadd.f32 %v74, %v447
  %v508 = vadd.f32 %v75, %v450
  %v509 = vadd.f32 %v76, %v455
  %v510 = vadd.f32 %v77, %v458
  %v511 = vadd.f32 %v78, %v463
  %v512 = vadd.f32 %v79, %v466
  %v513 = vadd.f32 %v80, %v471
  %v514 = vadd.f32 %v81, %v474
  %v515 = vadd.f32 %v82, %v479
  %v516 = vadd.f32 %v83, %v482
  %vm517 = vcmask 64512
  %518 = vst.msk [vmem:[#allocation2] sm:$0xff] %vm517, %v485
  %519 = vst.msk [vmem:[#allocation2 + $0x8] sm:$0xff] %vm517, %v486
  %520 = vst.msk [vmem:[#allocation2 + $0x10] sm:$0xff] %vm517, %v487
  %521 = vst.msk [vmem:[#allocation2 + $0x18] sm:$0xff] %vm517, %v488
  %522 = vst.msk [vmem:[#allocation2 + $0x20] sm:$0xff] %vm517, %v489
  %523 = vst.msk [vmem:[#allocation2 + $0x28] sm:$0xff] %vm517, %v490
  %524 = vst.msk [vmem:[#allocation2 + $0x30] sm:$0xff] %vm517, %v491
  %525 = vst.msk [vmem:[#allocation2 + $0x38] sm:$0xff] %vm517, %v492
  %526 = vst.msk [vmem:[#allocation2 + $0x40] sm:$0xff] %vm517, %v493
  %527 = vst.msk [vmem:[#allocation2 + $0x48] sm:$0xff] %vm517, %v494
  %528 = vst.msk [vmem:[#allocation2 + $0x50] sm:$0xff] %vm517, %v495
  %529 = vst.msk [vmem:[#allocation2 + $0x58] sm:$0xff] %vm517, %v496
  %530 = vst.msk [vmem:[#allocation2 + $0x60] sm:$0xff] %vm517, %v497
  %531 = vst.msk [vmem:[#allocation2 + $0x68] sm:$0xff] %vm517, %v498
  %532 = vst.msk [vmem:[#allocation2 + $0x70] sm:$0xff] %vm517, %v499
  %533 = vst.msk [vmem:[#allocation2 + $0x78] sm:$0xff] %vm517, %v500
  %534 = vst.msk [vmem:[#allocation2 + $0x80] sm:$0xff] %vm517, %v501
  %535 = vst.msk [vmem:[#allocation2 + $0x88] sm:$0xff] %vm517, %v502
  %536 = vst.msk [vmem:[#allocation2 + $0x90] sm:$0xff] %vm517, %v503
  %537 = vst.msk [vmem:[#allocation2 + $0x98] sm:$0xff] %vm517, %v504
  %538 = vst.msk [vmem:[#allocation2 + $0xa0] sm:$0xff] %vm517, %v505
  %539 = vst.msk [vmem:[#allocation2 + $0xa8] sm:$0xff] %vm517, %v506
  %540 = vst.msk [vmem:[#allocation2 + $0xb0] sm:$0xff] %vm517, %v507
  %541 = vst.msk [vmem:[#allocation2 + $0xb8] sm:$0xff] %vm517, %v508
  %542 = vst.msk [vmem:[#allocation2 + $0xc0] sm:$0xff] %vm517, %v509
  %543 = vst.msk [vmem:[#allocation2 + $0xc8] sm:$0xff] %vm517, %v510
  %544 = vst.msk [vmem:[#allocation2 + $0xd0] sm:$0xff] %vm517, %v511
  %545 = vst.msk [vmem:[#allocation2 + $0xd8] sm:$0xff] %vm517, %v512
  %546 = vst.msk [vmem:[#allocation2 + $0xe0] sm:$0xff] %vm517, %v513
  %547 = vst.msk [vmem:[#allocation2 + $0xe8] sm:$0xff] %vm517, %v514
  %548 = vst.msk [vmem:[#allocation2 + $0xf0] sm:$0xff] %vm517, %v515
  %549 = vst.msk [vmem:[#allocation2 + $0xf8] sm:$0xff] %vm517, %v516
  // Predicated region
  $region18: #{tpu_custom_call.1} parent=0 // pred_check
    %p550 = pneg %p15
  $region19: #{tpu_custom_call.1} parent=0 // pred_check_branch
    %552 = sbr.rel (%p550) target = $region21
  $region20: #{tpu_custom_call.1} parent=0 // pred_region
    %v553 = vld [vmem:[#allocation2] sm:$0xff]
    %v554 = vld [vmem:[#allocation2 + $0x8] sm:$0xff]
    %v555 = vld [vmem:[#allocation2 + $0x10] sm:$0xff]
    %v556 = vld [vmem:[#allocation2 + $0x18] sm:$0xff]
    %v557 = vld [vmem:[#allocation2 + $0x20] sm:$0xff]
    %v558 = vld [vmem:[#allocation2 + $0x28] sm:$0xff]
    %v559 = vld [vmem:[#allocation2 + $0x30] sm:$0xff]
    %v560 = vld [vmem:[#allocation2 + $0x38] sm:$0xff]
    %v561 = vld [vmem:[#allocation2 + $0x40] sm:$0xff]
    %v562 = vld [vmem:[#allocation2 + $0x48] sm:$0xff]
    %v563 = vld [vmem:[#allocation2 + $0x50] sm:$0xff]
    %v564 = vld [vmem:[#allocation2 + $0x58] sm:$0xff]
    %v565 = vld [vmem:[#allocation2 + $0x60] sm:$0xff]
    %v566 = vld [vmem:[#allocation2 + $0x68] sm:$0xff]
    %v567 = vld [vmem:[#allocation2 + $0x70] sm:$0xff]
    %v568 = vld [vmem:[#allocation2 + $0x78] sm:$0xff]
    %v569 = vld [vmem:[#allocation2 + $0x80] sm:$0xff]
    %v570 = vld [vmem:[#allocation2 + $0x88] sm:$0xff]
    %v571 = vld [vmem:[#allocation2 + $0x90] sm:$0xff]
    %v572 = vld [vmem:[#allocation2 + $0x98] sm:$0xff]
    %v573 = vld [vmem:[#allocation2 + $0xa0] sm:$0xff]
    %v574 = vld [vmem:[#allocation2 + $0xa8] sm:$0xff]
    %v575 = vld [vmem:[#allocation2 + $0xb0] sm:$0xff]
    %v576 = vld [vmem:[#allocation2 + $0xb8] sm:$0xff]
    %v577 = vld [vmem:[#allocation2 + $0xc0] sm:$0xff]
    %v578 = vld [vmem:[#allocation2 + $0xc8] sm:$0xff]
    %v579 = vld [vmem:[#allocation2 + $0xd0] sm:$0xff]
    %v580 = vld [vmem:[#allocation2 + $0xd8] sm:$0xff]
    %v581 = vld [vmem:[#allocation2 + $0xe0] sm:$0xff]
    %v582 = vld [vmem:[#allocation2 + $0xe8] sm:$0xff]
    %v583 = vld [vmem:[#allocation2 + $0xf0] sm:$0xff]
    %v584 = vld [vmem:[#allocation2 + $0xf8] sm:$0xff]
    %v585 = vld [vmem:[%s2] sm:$0xff]
    %v586 = vld [vmem:[%s2 + $0x8] sm:$0xff]
    %v587 = vld [vmem:[%s2 + $0x10] sm:$0xff]
    %v588 = vld [vmem:[%s2 + $0x18] sm:$0xff]
    %v589 = vld [vmem:[%s2 + $0x20] sm:$0xff]
    %v590 = vld [vmem:[%s2 + $0x28] sm:$0xff]
    %v591 = vld [vmem:[%s2 + $0x30] sm:$0xff]
    %v592 = vld [vmem:[%s2 + $0x38] sm:$0xff]
    %v593 = vld [vmem:[%s2 + $0x40] sm:$0xff]
    %v594 = vld [vmem:[%s2 + $0x48] sm:$0xff]
    %v595 = vld [vmem:[%s2 + $0x50] sm:$0xff]
    %v596 = vld [vmem:[%s2 + $0x58] sm:$0xff]
    %v597 = vld [vmem:[%s2 + $0x60] sm:$0xff]
    %v598 = vld [vmem:[%s2 + $0x68] sm:$0xff]
    %v599 = vld [vmem:[%s2 + $0x70] sm:$0xff]
    %v600 = vld [vmem:[%s2 + $0x78] sm:$0xff]
    %v601 = vld [vmem:[%s2 + $0x80] sm:$0xff]
    %v602 = vld [vmem:[%s2 + $0x88] sm:$0xff]
    %v603 = vld [vmem:[%s2 + $0x90] sm:$0xff]
    %v604 = vld [vmem:[%s2 + $0x98] sm:$0xff]
    %v605 = vld [vmem:[%s2 + $0xa0] sm:$0xff]
    %v606 = vld [vmem:[%s2 + $0xa8] sm:$0xff]
    %v607 = vld [vmem:[%s2 + $0xb0] sm:$0xff]
    %v608 = vld [vmem:[%s2 + $0xb8] sm:$0xff]
    %v609 = vld [vmem:[%s2 + $0xc0] sm:$0xff]
    %v610 = vld [vmem:[%s2 + $0xc8] sm:$0xff]
    %v611 = vld [vmem:[%s2 + $0xd0] sm:$0xff]
    %v612 = vld [vmem:[%s2 + $0xd8] sm:$0xff]
    %v613 = vld [vmem:[%s2 + $0xe0] sm:$0xff]
    %v614 = vld [vmem:[%s2 + $0xe8] sm:$0xff]
    %v615 = vld [vmem:[%s2 + $0xf0] sm:$0xff]
    %v616 = vld [vmem:[%s2 + $0xf8] sm:$0xff]
    %v617 = vsub.f32 %v553, %v585
    %v618 = vsub.f32 %v554, %v586
    %v619 = vsub.f32 %v555, %v587
    %v620 = vsub.f32 %v556, %v588
    %v621 = vsub.f32 %v557, %v589
    %v622 = vsub.f32 %v558, %v590
    %v623 = vsub.f32 %v559, %v591
    %v624 = vsub.f32 %v560, %v592
    %v625 = vsub.f32 %v561, %v593
    %v626 = vsub.f32 %v562, %v594
    %v627 = vsub.f32 %v563, %v595
    %v628 = vsub.f32 %v564, %v596
    %v629 = vsub.f32 %v565, %v597
    %v630 = vsub.f32 %v566, %v598
    %v631 = vsub.f32 %v567, %v599
    %v632 = vsub.f32 %v568, %v600
    %v633 = vsub.f32 %v569, %v601
    %v634 = vsub.f32 %v570, %v602
    %v635 = vsub.f32 %v571, %v603
    %v636 = vsub.f32 %v572, %v604
    %v637 = vsub.f32 %v573, %v605
    %v638 = vsub.f32 %v574, %v606
    %v639 = vsub.f32 %v575, %v607
    %v640 = vsub.f32 %v576, %v608
    %v641 = vsub.f32 %v577, %v609
    %v642 = vsub.f32 %v578, %v610
    %v643 = vsub.f32 %v579, %v611
    %v644 = vsub.f32 %v580, %v612
    %v645 = vsub.f32 %v581, %v613
    %v646 = vsub.f32 %v582, %v614
    %v647 = vsub.f32 %v583, %v615
    %v648 = vsub.f32 %v584, %v616
    %649 = vst.msk [vmem:[%s3] sm:$0xff] %vm517, %v617
    %650 = vst.msk [vmem:[%s3 + $0x8] sm:$0xff] %vm517, %v618
    %651 = vst.msk [vmem:[%s3 + $0x10] sm:$0xff] %vm517, %v619
    %652 = vst.msk [vmem:[%s3 + $0x18] sm:$0xff] %vm517, %v620
    %653 = vst.msk [vmem:[%s3 + $0x20] sm:$0xff] %vm517, %v621
    %654 = vst.msk [vmem:[%s3 + $0x28] sm:$0xff] %vm517, %v622
    %655 = vst.msk [vmem:[%s3 + $0x30] sm:$0xff] %vm517, %v623
    %656 = vst.msk [vmem:[%s3 + $0x38] sm:$0xff] %vm517, %v624
    %657 = vst.msk [vmem:[%s3 + $0x40] sm:$0xff] %vm517, %v625
    %658 = vst.msk [vmem:[%s3 + $0x48] sm:$0xff] %vm517, %v626
    %659 = vst.msk [vmem:[%s3 + $0x50] sm:$0xff] %vm517, %v627
    %660 = vst.msk [vmem:[%s3 + $0x58] sm:$0xff] %vm517, %v628
    %661 = vst.msk [vmem:[%s3 + $0x60] sm:$0xff] %vm517, %v629
    %662 = vst.msk [vmem:[%s3 + $0x68] sm:$0xff] %vm517, %v630
    %663 = vst.msk [vmem:[%s3 + $0x70] sm:$0xff] %vm517, %v631
    %664 = vst.msk [vmem:[%s3 + $0x78] sm:$0xff] %vm517, %v632
    %665 = vst.msk [vmem:[%s3 + $0x80] sm:$0xff] %vm517, %v633
    %666 = vst.msk [vmem:[%s3 + $0x88] sm:$0xff] %vm517, %v634
    %667 = vst.msk [vmem:[%s3 + $0x90] sm:$0xff] %vm517, %v635
    %668 = vst.msk [vmem:[%s3 + $0x98] sm:$0xff] %vm517, %v636
    %669 = vst.msk [vmem:[%s3 + $0xa0] sm:$0xff] %vm517, %v637
    %670 = vst.msk [vmem:[%s3 + $0xa8] sm:$0xff] %vm517, %v638
    %671 = vst.msk [vmem:[%s3 + $0xb0] sm:$0xff] %vm517, %v639
    %672 = vst.msk [vmem:[%s3 + $0xb8] sm:$0xff] %vm517, %v640
    %673 = vst.msk [vmem:[%s3 + $0xc0] sm:$0xff] %vm517, %v641
    %674 = vst.msk [vmem:[%s3 + $0xc8] sm:$0xff] %vm517, %v642
    %675 = vst.msk [vmem:[%s3 + $0xd0] sm:$0xff] %vm517, %v643
    %676 = vst.msk [vmem:[%s3 + $0xd8] sm:$0xff] %vm517, %v644
    %677 = vst.msk [vmem:[%s3 + $0xe0] sm:$0xff] %vm517, %v645
    %678 = vst.msk [vmem:[%s3 + $0xe8] sm:$0xff] %vm517, %v646
    %679 = vst.msk [vmem:[%s3 + $0xf0] sm:$0xff] %vm517, %v647
    %680 = vst.msk [vmem:[%s3 + $0xf8] sm:$0xff] %vm517, %v648
  $region21: #{tpu_custom_call.1} parent=0 // pred_fallthru
    _
  // Predicated region
  $region22: #{tpu_custom_call.1} parent=0 // pred_check
    _
  $region23: #{tpu_custom_call.1} parent=0 // pred_check_branch
    %682 = sbr.rel (0) target = $region25
  $region24: #{tpu_custom_call.1} parent=0 // pred_region
    _
  $region25: #{tpu_custom_call.1} parent=0 // pred_fallthru
    _
  // Predicated region
  $region26: #{tpu_custom_call.1} parent=0 // pred_check
    _
  $region27: #{tpu_custom_call.1} parent=0 // pred_check_branch
    %684 = sbr.rel (0) target = $region29
  $region28: #{tpu_custom_call.1} parent=0 // pred_region
    _
  $region29: #{tpu_custom_call.1} parent=0 // pred_fallthru
    _

</llo_original>
